<compile_context>
chip_gen: v6e
topology: v6e:2x2x1
jax: 0.10.0
libtpu: 0.0.40
codegen_flags: <defaults>
</compile_context>

<pallas_src>
import functools
import math

import jax
import jax.numpy as jnp
from jax.experimental import pallas as pl
from jax.experimental.pallas import tpu as pltpu

LANE = 128      # TPU vreg lane width; fused-weight / output column padding.
_SCORE_W = 8    # width of the overlapping lane windows used for the score dot


def _gat_kernel(h_ref, w_big_ref, o_ref, *, bt, n, f_out, concat, use_bf16):
    # h_ref:     (Bt, N, F_in+1)   Bt graphs per grid step, ones column appended
    # w_big_ref: (F_in+1, LANE)    cols [0:F_out]=W, F_out=W@a1, F_out+1=e_ones,
    #                              F_out+2=W@a2, rest zero
    # o_ref:     (Bt, N, LANE)     cols [0:F_out] are the real output
    f_in1 = h_ref.shape[-1]

    # --- Fused, lane-dense first matmul with Bt*N LHS rows (fills the MXU). ---
    # (Bt, N, f) -> (Bt*N, f) is a free retag when N is a sublane multiple.
    h2d = h_ref[...].reshape(bt * n, f_in1)
    wh = jnp.dot(h2d, w_big_ref[...], preferred_element_type=jnp.float32)
    wh = wh.reshape(bt, n, LANE)                       # f32 (Bt, N, LANE)

    # --- Attention logits as a q@k^T MXU dot (no transposes / XLU moves). ---
    # q lanes: [Wh@a1, 1, Wh@a2, 0...]; k lanes: [1, Wh@a2, 0...]
    # => e[b,i,j] = Wh[b,i]@a1 + Wh[b,j]@a2  (remaining products are exact 0).
    q = wh[:, :, f_out:f_out + _SCORE_W]
    k = wh[:, :, f_out + 1:f_out + 1 + _SCORE_W]
    e = jnp.einsum('bik,bjk->bij', q, k,
                   preferred_element_type=jnp.float32)  # (Bt, N, N)

    # Reference applies LeakyReLU(alpha) then masks on `> 0`; for alpha > 0 the
    # LeakyReLU is sign-preserving and identity on positives, so masking the
    # raw logits is bit-identical (the LeakyReLU select is folded away).
    att = jnp.where(e > 0, e, -9e15)

    # Row softmax (dim=1 of each graph). Reciprocal on the EUP (approx vrcp).
    m = jnp.max(att, axis=2, keepdims=True)
    p = jnp.exp(att - m)
    att = p * pl.reciprocal(jnp.sum(p, axis=2, keepdims=True), approx=True)

    # TODO(synk): F.dropout on the attention weights is a training-time op;
    # at inference (training=False) it is a no-op and is not implemented.

    if use_bf16:
        att = att.astype(jnp.bfloat16)                  # values in [0, 1]
        wh = wh.astype(jnp.bfloat16)

    # Lane-dense output matmul; columns >= F_out are ignored / trimmed later.
    hp = jnp.einsum('bij,bjk->bik', att, wh,
                    preferred_element_type=jnp.float32)

    if concat:
        # ELU(alpha=1.0)
        hp = jnp.where(hp > 0, hp, jnp.exp(hp) - 1.0)

    o_ref[...] = hp


def _pick_block_b(batch, n):
    """Graphs per grid step: fill ~256 MXU rows, keep >=2 parallel steps."""
    target = max(1, 256 // max(n, 1))
    cap = min(batch, target)
    if batch >= 2:
        cap = max(1, min(cap, batch // 2))   # >=2 steps so v7x's 2nd TC has work
    for bt in range(cap, 0, -1):
        if batch % bt == 0:
            return bt
    return 1


def _vmem_limit_bytes():
    """Generation-aware scoped-VMEM limit (<=56 MiB on v7x, 96 MiB otherwise)."""
    try:
        cap = pltpu.get_tpu_info().vmem_capacity_bytes
        return int(min(96 * 1024 * 1024, (cap * 7) // 8))
    except Exception:
        return 48 * 1024 * 1024


def gat_layer(h, adj, W, a, *, alpha=0.2, dropout=0.0, concat=True, flag=0,
              use_bf16=True, block_b=None, trim_output=True):
    """Pallas GAT layer matching the PyTorch reference forward.

    `adj` is accepted for signature parity but (exactly like the reference
    forward) is NOT used -- the reference masks on the sign of the attention
    logits, not on adjacency.  `alpha` only affects values that are masked out
    anyway (requires alpha > 0).  Dropout is an inference no-op.
    `flag == 1` in the reference dumps the attention matrix to a text file
    (host-side I/O); not implemented.  TODO(synk): flag==1 np.savetxt dump.

    h may be (N, F_in) for a single graph or (B, N, F_in) for a batch; Bt
    graphs are processed per grid step along a 'parallel' axis.
    With trim_output=False the padded (.., N, 128) slab is returned (avoids an
    extra full-output HBM round trip when a consumer can be fused downstream).
    """
    del adj, dropout, flag
    assert alpha > 0, "kernel folds LeakyReLU into the >0 mask; needs alpha > 0"

    squeeze = (h.ndim == 2)
    if squeeze:
        h = h[None]
    h = h.astype(jnp.float32)
    batch, n, f_in = h.shape
    f_out = W.shape[1]
    assert f_out + _SCORE_W + 1 <= LANE, "F_out too large for the fused 128-lane layout"

    W = W.astype(jnp.float32)
    a = a.astype(jnp.float32)
    wa1 = W @ a[:f_out, :]                    # (F_in, 1)
    wa2 = W @ a[f_out:, :]                    # (F_in, 1)

    # Fused, lane-dense weight: [W | W@a1 | e_ones | W@a2 | 0-pad] -> (F_in+1, 128)
    f_in1 = f_in + 1
    w_big = jnp.zeros((f_in1, LANE), jnp.float32)
    w_big = w_big.at[:f_in, :f_out].set(W)
    w_big = w_big.at[:f_in, f_out].set(wa1[:, 0])
    w_big = w_big.at[f_in, f_out + 1].set(1.0)          # constant-1 column
    w_big = w_big.at[:f_in, f_out + 2].set(wa2[:, 0])

    # h with a ones feature appended (drives the constant-1 column).
    h_aug = jnp.concatenate([h, jnp.ones((batch, n, 1), jnp.float32)], axis=-1)

    in_dtype = jnp.bfloat16 if use_bf16 else jnp.float32
    h_aug = h_aug.astype(in_dtype)
    w_big = w_big.astype(in_dtype)

    bt = _pick_block_b(batch, n) if block_b is None else block_b
    assert batch % bt == 0, "batch must be divisible by the batch block size"
    grid = (batch // bt,)

    kernel = functools.partial(_gat_kernel, bt=bt, n=n, f_out=f_out,
                               concat=concat, use_bf16=use_bf16)

    out = pl.pallas_call(
        kernel,
        out_shape=jax.ShapeDtypeStruct((batch, n, LANE), jnp.float32),
        grid_spec=pltpu.PrefetchScalarGridSpec(
            num_scalar_prefetch=0,
            grid=grid,
            in_specs=[
                pl.BlockSpec((bt, n, f_in1), lambda i: (i, 0, 0)),
                pl.BlockSpec((f_in1, LANE), lambda i: (0, 0)),
            ],
            out_specs=pl.BlockSpec((bt, n, LANE), lambda i: (i, 0, 0)),
        ),
        compiler_params=pltpu.CompilerParams(
            dimension_semantics=("parallel",),
            vmem_limit_bytes=_vmem_limit_bytes()),
    )(h_aug, w_big)

    if trim_output:
        out = out[:, :, :f_out]
    return out[0] if squeeze else out


def _xavier_uniform(key, shape, gain):
    fan_in, fan_out = shape
    bound = gain * math.sqrt(6.0 / (fan_in + fan_out))
    return jax.random.uniform(key, shape, jnp.float32, -bound, bound)


def _reference(h, W, a, alpha, concat):
    # Pure-JAX fp32 mirror of the PyTorch forward (LeakyReLU kept explicitly).
    Wh = h @ W
    f_out = W.shape[1]
    wh1 = Wh @ a[:f_out, :]
    wh2 = Wh @ a[f_out:, :]
    e = wh1 + wh2.T
    e = jnp.where(e > 0, e, alpha * e)
    att = jnp.where(e > 0, e, -9e15)
    att = jax.nn.softmax(att, axis=1)
    hp = att @ Wh
    return jnp.where(hp > 0, hp, jnp.exp(hp) - 1.0) if concat else hp


def _reference_bf16(h, W, a, alpha, concat):
    # Mirror of the kernel's bf16 operand casts (same fusion structure), used
    # to validate the use_bf16 path apples-to-apples: bf16 MXU inputs with
    # fp32 accumulation everywhere the kernel does it.
    f_out = W.shape[1]
    hb = h.astype(jnp.bfloat16)
    Wb = W.astype(jnp.bfloat16)
    wa1 = (W @ a[:f_out, :]).astype(jnp.bfloat16)
    wa2 = (W @ a[f_out:, :]).astype(jnp.bfloat16)
    Wh = jnp.dot(hb, Wb, preferred_element_type=jnp.float32)
    wh1 = jnp.dot(hb, wa1, preferred_element_type=jnp.float32)
    wh2 = jnp.dot(hb, wa2, preferred_element_type=jnp.float32)
    e = wh1 + wh2.T
    e = jnp.where(e > 0, e, alpha * e)
    att = jnp.where(e > 0, e, -9e15)
    att = jax.nn.softmax(att, axis=1)
    hp = jnp.dot(att.astype(jnp.bfloat16), Wh.astype(jnp.bfloat16),
                 preferred_element_type=jnp.float32)
    return jnp.where(hp > 0, hp, jnp.exp(hp) - 1.0) if concat else hp


if __name__ == "__main__":
    B, N, F_IN, F_OUT = 4, 8, 16, 8
    ALPHA = 0.2            # LeakyReLU negative slope (folded into the mask)
    DROPOUT = 0.6          # unused at inference
    CONCAT = True

    key = jax.random.PRNGKey(0)
    k_h, k_adj, k_w, k_a = jax.random.split(key, 4)

    h = jax.random.normal(k_h, (B, N, F_IN), dtype=jnp.float32)
    adj = (jax.random.uniform(k_adj, (B, N, N)) > 0.5).astype(jnp.float32)  # parity only
    W = _xavier_uniform(k_w, (F_IN, F_OUT), gain=1.414)
    a = _xavier_uniform(k_a, (2 * F_OUT, 1), gain=1.414)

    # --- fp32 path: strict parity vs. the faithful PyTorch-equivalent reference.
    out32 = gat_layer(h, adj, W, a, alpha=ALPHA, dropout=DROPOUT,
                      concat=CONCAT, use_bf16=False)
    out32 = jax.block_until_ready(out32)
    assert out32.shape == (B, N, F_OUT)
    ref32 = jax.vmap(lambda hh: _reference(hh, W, a, ALPHA, CONCAT))(h)
    # Tolerance covers the approx (EUP) reciprocal in the softmax denominator.
    assert jnp.allclose(out32, ref32, atol=2e-3, rtol=2e-3), \
        float(jnp.max(jnp.abs(out32 - ref32)))

    # --- bf16-MXU path (default): validated against a reference that applies
    # the same bf16 operand casts (parity vs. the fp32 torch forward loosens to
    # ~1e-2 relative and is mask-sensitive near e==0, so the fp32 path above is
    # the strict check).
    out16 = gat_layer(h, adj, W, a, alpha=ALPHA, dropout=DROPOUT, concat=CONCAT)
    out16 = jax.block_until_ready(out16)
    assert out16.shape == (B, N, F_OUT)
    ref16 = jax.vmap(lambda hh: _reference_bf16(hh, W, a, ALPHA, CONCAT))(h)
    assert jnp.allclose(out16, ref16, atol=2e-2, rtol=2e-2), \
        float(jnp.max(jnp.abs(out16 - ref16)))

    # --- single-graph call (module-equivalent signature).
    out1 = gat_layer(h[0], adj[0], W, a, alpha=ALPHA, concat=CONCAT, use_bf16=False)
    out1 = jax.block_until_ready(out1)
    assert out1.shape == (N, F_OUT)
    assert jnp.allclose(out1, ref32[0], atol=2e-3, rtol=2e-3)

    print("KERNEL_OK")
</pallas_src>

<mosaic_0001>
module attributes {stable_mosaic.version = 11 : i64} {
  func.func @_gat_kernel(%arg0: i32, %arg1: memref<2x8x17xf32, #tpu.memory_space<vmem>>, %arg2: memref<17x128xf32, #tpu.memory_space<vmem>>, %arg3: memref<2x8x128xf32, #tpu.memory_space<vmem>>) attributes {dimension_semantics = [#tpu.dimension_semantics<parallel>], iteration_bounds = array<i64: 2>, scalar_prefetch = 0 : i64, scratch_operands = 0 : i64, tpu.core_type = #tpu.core_type<tc>, window_params = [{transform_indices = @transform_0, window_bounds = array<i64: 2, 8, 17>}, {pipeline_mode = #tpu.pipeline_mode<synchronous>, transform_indices = @transform_1, window_bounds = array<i64: 17, 128>}, {transform_indices = @transform_2, window_bounds = array<i64: 2, 8, 128>}]} {
    %c0 = arith.constant 0 : index
    %c0_0 = arith.constant 0 : index
    %c0_1 = arith.constant 0 : index
    %0 = vector.load %arg1[%c0, %c0_0, %c0_1] : memref<2x8x17xf32, #tpu.memory_space<vmem>>, vector<2x8x17xf32>
    %1 = vector.shape_cast %0 : vector<2x8x17xf32> to vector<16x17xf32>
    %c0_2 = arith.constant 0 : index
    %c0_3 = arith.constant 0 : index
    %2 = vector.load %arg2[%c0_2, %c0_3] : memref<17x128xf32, #tpu.memory_space<vmem>>, vector<17x128xf32>
    %cst = arith.constant dense<0.000000e+00> : vector<16x128xf32>
    %3 = tpu.matmul %1, %2, %cst {dimension_numbers = #tpu.dot_dimension_numbers<[1], [0], [0], [1], [0, 0, 1, 1], [], []>} : vector<16x17xf32>, vector<17x128xf32>, vector<16x128xf32> -> vector<16x128xf32>
    %4 = vector.shape_cast %3 : vector<16x128xf32> to vector<2x8x128xf32>
    %5 = vector.extract_strided_slice %4 {offsets = [0, 0, 8], sizes = [2, 8, 8], strides = [1, 1, 1]} : vector<2x8x128xf32> to vector<2x8x8xf32>
    %6 = vector.extract_strided_slice %4 {offsets = [0, 0, 9], sizes = [2, 8, 8], strides = [1, 1, 1]} : vector<2x8x128xf32> to vector<2x8x8xf32>
    "tpu.trace_start"() <{level = 10 : i32, message = "bik,bjk->bij"}> : () -> ()
    %cst_4 = arith.constant dense<0.000000e+00> : vector<2x8x8xf32>
    %7 = tpu.matmul %5, %6, %cst_4 {dimension_numbers = #tpu.dot_dimension_numbers<[2], [2], [1], [1], [0, 0, 0, 1, 1, 1], [0], [0]>} : vector<2x8x8xf32>, vector<2x8x8xf32>, vector<2x8x8xf32> -> vector<2x8x8xf32>
    %cst_5 = arith.constant 0.000000e+00 : f32
    "tpu.trace_stop"() : () -> ()
    %8 = vector.broadcast %cst_5 : f32 to vector<2x8x8xf32>
    %9 = arith.cmpf ogt, %7, %8 : vector<2x8x8xf32>
    %cst_6 = arith.constant -9.000000e+15 : f32
    %10 = vector.broadcast %cst_6 : f32 to vector<2x8x8xf32>
    %11 = arith.select %9, %7, %10 : vector<2x8x8xi1>, vector<2x8x8xf32>
    %cst_7 = arith.constant dense<0xFF800000> : vector<2x8xf32>
    %12 = vector.multi_reduction <maximumf>, %11, %cst_7 [2] : vector<2x8x8xf32> to vector<2x8xf32>
    %13 = vector.shape_cast %12 : vector<2x8xf32> to vector<2x8x1xf32>
    %14 = vector.broadcast %13 : vector<2x8x1xf32> to vector<2x8x8xf32>
    %15 = arith.subf %11, %14 : vector<2x8x8xf32>
    %16 = math.exp %15 : vector<2x8x8xf32>
    %cst_8 = arith.constant dense<0.000000e+00> : vector<2x8xf32>
    %17 = vector.multi_reduction <add>, %16, %cst_8 [2] : vector<2x8x8xf32> to vector<2x8xf32>
    %18 = vector.shape_cast %17 : vector<2x8xf32> to vector<2x8x1xf32>
    %19 = tpu.reciprocal %18 {approx = true} : vector<2x8x1xf32> -> vector<2x8x1xf32>
    %20 = vector.broadcast %19 : vector<2x8x1xf32> to vector<2x8x8xf32>
    %21 = arith.mulf %16, %20 : vector<2x8x8xf32>
    "tpu.trace_start"() <{level = 10 : i32, message = "bij,bjk->bik"}> : () -> ()
    %cst_9 = arith.constant dense<0.000000e+00> : vector<2x8x128xf32>
    %22 = tpu.matmul %21, %4, %cst_9 {dimension_numbers = #tpu.dot_dimension_numbers<[2], [1], [1], [2], [0, 0, 0, 1, 1, 2], [0], [0]>} : vector<2x8x8xf32>, vector<2x8x128xf32>, vector<2x8x128xf32> -> vector<2x8x128xf32>
    %cst_10 = arith.constant 0.000000e+00 : f32
    "tpu.trace_stop"() : () -> ()
    %23 = vector.broadcast %cst_10 : f32 to vector<2x8x128xf32>
    %24 = arith.cmpf ogt, %22, %23 : vector<2x8x128xf32>
    %25 = math.exp %22 : vector<2x8x128xf32>
    %cst_11 = arith.constant 1.000000e+00 : f32
    %26 = vector.broadcast %cst_11 : f32 to vector<2x8x128xf32>
    %27 = arith.subf %25, %26 : vector<2x8x128xf32>
    %28 = arith.select %24, %22, %27 : vector<2x8x128xi1>, vector<2x8x128xf32>
    %c0_12 = arith.constant 0 : index
    %c0_13 = arith.constant 0 : index
    %c0_14 = arith.constant 0 : index
    %29 = vector.load %arg3[%c0_12, %c0_13, %c0_14] : memref<2x8x128xf32, #tpu.memory_space<vmem>>, vector<2x8x128xf32>
    tpu.vector_store %arg3[%c0_12, %c0_13, %c0_14], %28 {strides = array<i32>} : memref<2x8x128xf32, #tpu.memory_space<vmem>>, vector<2x8x128xf32>,
    return
  }
  func.func @transform_0(%arg0: i32) -> (i32, i32, i32) {
    %c0_i32 = arith.constant 0 : i32
    %c0_i32_0 = arith.constant 0 : i32
    %c0_i32_1 = arith.constant 0 : i32
    return %arg0, %c0_i32, %c0_i32_0 : i32, i32, i32
  }
  func.func @transform_1(%arg0: i32) -> (i32, i32) {
    %c0_i32 = arith.constant 0 : i32
    %c0_i32_0 = arith.constant 0 : i32
    %c0_i32_1 = arith.constant 0 : i32
    return %c0_i32, %c0_i32_0 : i32, i32
  }
  func.func @transform_2(%arg0: i32) -> (i32, i32, i32) {
    %c0_i32 = arith.constant 0 : i32
    %c0_i32_0 = arith.constant 0 : i32
    %c0_i32_1 = arith.constant 0 : i32
    return %arg0, %c0_i32, %c0_i32_0 : i32, i32, i32
  }
}

</mosaic_0001>

<llo_original>
// kernel: tpu_custom_call.1
$region0: #{tpu_custom_call.1}
  #allocation0 [shape = 'u32[]', space=smem, size = 0x4, offset = 0x4, fixed_abs, tag = 'smem constant byte address 0x4 - core index']
  #allocation1 [shape = 'u32[144,128]{1,0:T(1,128)}', space=vmem, size = 0x12000, scoped, tag = 'internal scratch']
  %s0 = inlined_call_operand.hbm [shape: f32[4,8,17], index: 0, kind: input, shape index: {}]
  %s1 = inlined_call_operand.hbm [shape: f32[17,128], index: 1, kind: input, shape index: {}]
  %s2 = inlined_call_operand.hbm [shape: f32[4,8,128], index: 2, kind: output, shape index: {}]
  %s3 = sld [smem:[#allocation0]]
  $region49: #{tpu_custom_call.1} parent=0
    _
  %s5 = ssub.s32 1, %s3
  %s6 = scalar_select 0, %s5, %s3
  $region1: #{tpu_custom_call.1} parent=0
    #allocation2 [shape = 'u8[16384]{0}', space=vmem, size = 0x4000, scoped, tag = 'input window, operand 0']
    #allocation3 [shape = 's32[2]{0}', space=sflag, size = 0x8, scoped, tag = 'scoped memory for tpu_custom_call.1']
    #allocation4 [shape = 's32[2]{0}', space=sflag, size = 0x8, scoped, tag = 'scoped memory for tpu_custom_call.1']
    #allocation5 [shape = 'u8[12288]{0}', space=vmem, size = 0x3000, scoped, tag = 'input window, operand 1, single buffered']
    #allocation6 [shape = 's32[1]{0}', space=sflag, size = 0x4, scoped, tag = 'scoped memory for tpu_custom_call.1']
    #allocation7 [shape = 'u8[16384]{0}', space=vmem, size = 0x4000, scoped, tag = 'output window, operand 0']
    %7 = vsyncpa [#allocation3], 0
    %s8 = scalar_lea.sflag [#allocation3], 1
    %9 = vsyncpa %s8, 0
    %10 = vsyncpa [#allocation6], 0
    %11 = vsyncpa [#allocation4], 0
    %s12 = scalar_lea.sflag [#allocation4], 1
    %13 = vsyncpa %s12, 0
    loop: start=0, step=1, limit=4
    $region2: #{tpu_custom_call.1} parent=1 // loop_pre_header
      _
    $region3: #{tpu_custom_call.1} parent=1 // loop_header
      %s15 = sphi 0, %s19
      %p16 = scmp.ge.s32.totalorder %s15, 4
      %s25 = sphi 0, %s27
      %s28 = sphi 0, %s25
      %s29 = sphi 0, %s28
      %s45 = sphi 0, %s29
      %s49 = sphi 0, %s49
      %s51 = sphi 0, %s49
      %s52 = sphi 0, %s51
      %s66 = sphi 0, %s52
      %s72 = sphi 0, %s74
      %s75 = sphi 0, %s72
      %s76 = sphi 0, %s75
      %s92 = sphi 0, %s76
    $region4: #{tpu_custom_call.1} parent=1 // loop_header_branch
      %18 = sbr.rel (%p16) target = $region8
    $region5: #{tpu_custom_call.1} parent=1 // loop_body
      %s20 = ssub.s32 %s15, 1
      %s21 = ssub.s32 %s15, 2
      %s22 = sadd.s32 %s15, 1
      %s23 = ssub.s32 %s15, %s22
      %p24 = scmp.eq.s32.totalorder %s23, 0
      %s26 = sadd.s32 %s25, 1
      %s27 = scalar_select %p24, %s25, %s26
      %p30 = pneg %p24
      %p31 = scmp.eq.s32.totalorder %s15, 1
      %p32 = por %p30, %p31
      %p33 = scmp.ne.s32.totalorder %s25, %s28
      %p34 = scmp.eq.s32.totalorder %s15, 0
      %p35 = por %p33, %p34
      %p36 = scmp.ne.s32.totalorder %s25, %s28
      %p37 = scmp.eq.s32.totalorder %s20, 1
      %p38 = por %p36, %p37
      %p39 = scmp.ne.s32.totalorder %s28, %s29
      %p40 = scmp.eq.s32.totalorder %s20, 0
      %p41 = por %p39, %p40
      %p42 = scmp.ne.s32.totalorder %s28, %s29
      %p43 = scmp.eq.s32.totalorder %s21, 1
      %p44 = por %p42, %p43
      %p46 = scmp.ne.s32.totalorder %s29, %s45
      %p47 = scmp.eq.s32.totalorder %s21, 0
      %p48 = por %p46, %p47
      %s50 = sadd.s32 %s49, 1
      %p53 = scmp.eq.s32.totalorder %s15, 1
      %p54 = scmp.ne.s32.totalorder %s49, %s51
      %p55 = scmp.eq.s32.totalorder %s15, 0
      %p56 = por %p54, %p55
      %p57 = scmp.ne.s32.totalorder %s49, %s51
      %p58 = scmp.eq.s32.totalorder %s20, 1
      %p59 = por %p57, %p58
      %p60 = scmp.ne.s32.totalorder %s51, %s52
      %p61 = scmp.eq.s32.totalorder %s20, 0
      %p62 = por %p60, %p61
      %p63 = scmp.ne.s32.totalorder %s51, %s52
      %p64 = scmp.eq.s32.totalorder %s21, 1
      %p65 = por %p63, %p64
      %p67 = scmp.ne.s32.totalorder %s52, %s66
      %p68 = scmp.eq.s32.totalorder %s21, 0
      %p69 = por %p67, %p68
      %s70 = ssub.s32 %s15, %s22
      %p71 = scmp.eq.s32.totalorder %s70, 0
      %s73 = sadd.s32 %s72, 1
      %s74 = scalar_select %p71, %s72, %s73
      %p77 = pneg %p71
      %p78 = scmp.eq.s32.totalorder %s15, 1
      %p79 = por %p77, %p78
      %p80 = scmp.ne.s32.totalorder %s72, %s75
      %p81 = scmp.eq.s32.totalorder %s15, 0
      %p82 = por %p80, %p81
      %p83 = scmp.ne.s32.totalorder %s72, %s75
      %p84 = scmp.eq.s32.totalorder %s20, 1
      %p85 = por %p83, %p84
      %p86 = scmp.ne.s32.totalorder %s75, %s76
      %p87 = scmp.eq.s32.totalorder %s20, 0
      %p88 = por %p86, %p87
      %p89 = scmp.ne.s32.totalorder %s75, %s76
      %p90 = scmp.eq.s32.totalorder %s21, 1
      %p91 = por %p89, %p90
      %p93 = scmp.ne.s32.totalorder %s76, %s92
      %p94 = scmp.eq.s32.totalorder %s21, 0
      %p95 = por %p93, %p94
      %p96 = scmp.le.s32.totalorder 1, %s15
      %p97 = scmp.lt.s32.totalorder %s15, 3
      %p98 = pnand %p96, %p97
      %p99 = pneg %p98
      // Predicated region
      $region9: #{tpu_custom_call.1} parent=5 // pred_check
        _
      $region10: #{tpu_custom_call.1} parent=5 // pred_check_branch
        %101 = sbr.rel (%p98) target = $region12
      $region11: #{tpu_custom_call.1} parent=5 // pred_region
        %s102 = ssub.s32 %s15, 1
        // Predicated region
        $region13: #{tpu_custom_call.1} parent=11 // pred_check
          %p103 = pneg %p62
        $region14: #{tpu_custom_call.1} parent=11 // pred_check_branch
          %105 = sbr.rel (%p103) target = $region16
        $region15: #{tpu_custom_call.1} parent=11 // pred_region
          %s107 = ssub.s32 384, 384
          %108 = vsyncadd [#allocation6], %s107
          %s109 = sshll.u32 [#allocation5], 4
          %s110 = int_to_ptr.vmem [resolvable:$true] %s109
          %115 = dma.hbm_to_vmem [thread:$0]  %s1, 384, %s110, [#allocation6], 128, 128, 8
        $region16: #{tpu_custom_call.1} parent=11 // pred_fallthru
          _
      $region12: #{tpu_custom_call.1} parent=5 // pred_fallthru
        _
      %p116 = scmp.lt.s32.totalorder %s15, 2
      // Predicated region
      $region17: #{tpu_custom_call.1} parent=5 // pred_check
        %p117 = pneg %p116
      $region18: #{tpu_custom_call.1} parent=5 // pred_check_branch
        %119 = sbr.rel (%p117) target = $region20
      $region19: #{tpu_custom_call.1} parent=5 // pred_region
        // Predicated region
        $region21: #{tpu_custom_call.1} parent=19 // pred_check
          %p120 = pneg %p35
        $region22: #{tpu_custom_call.1} parent=19 // pred_check_branch
          %122 = sbr.rel (%p120) target = $region24
        $region23: #{tpu_custom_call.1} parent=19 // pred_region
          %s123 = sand.u32 %s25, 1
          %s124 = scalar_lea.sflag [#allocation3], %s123
          %s125 = sand.u32 %s25, 1
          %s126 = smul.addr %s125, 16
          %s127 = scalar_lea.vmem [#allocation2], %s126
          %s128 = smul.u32 2, %s15
          %s130 = ssub.s32 256, 256
          %131 = vsyncadd %s124, %s130
          %s132 = smul.addr %s128, 128
          %s133 = scalar_lea.hbm %s0, %s132
          %s134 = sshll.u32 %s127, 4
          %s135 = int_to_ptr.vmem [resolvable:$true] %s134
          %140 = dma.hbm_to_vmem [thread:$0]  %s133, 256, %s135, %s124, 128, 128, 8
        $region24: #{tpu_custom_call.1} parent=19 // pred_fallthru
          _
      $region20: #{tpu_custom_call.1} parent=5 // pred_fallthru
        _
      %p141 = scmp.le.s32.totalorder 1, %s15
      %p142 = scmp.lt.s32.totalorder %s15, 3
      %p143 = pnand %p141, %p142
      %p144 = pneg %p143
      // Predicated region
      $region25: #{tpu_custom_call.1} parent=5 // pred_check
        _
      $region26: #{tpu_custom_call.1} parent=5 // pred_check_branch
        %146 = sbr.rel (%p143) target = $region28
      $region27: #{tpu_custom_call.1} parent=5 // pred_region
        %s147 = ssub.s32 %s15, 1
        %s148 = sand.u32 %s28, 1
        %s149 = scalar_lea.sflag [#allocation3], %s148
        %s150 = sand.u32 %s28, 1
        %s151 = smul.addr %s150, 16
        %s152 = scalar_lea.vmem [#allocation2], %s151
        // Predicated region
        $region29: #{tpu_custom_call.1} parent=27 // pred_check
          %p153 = pneg %p41
        $region30: #{tpu_custom_call.1} parent=27 // pred_check_branch
          %155 = sbr.rel (%p153) target = $region32
        $region31: #{tpu_custom_call.1} parent=27 // pred_region
          %156 = dma.done %s149, 256
        $region32: #{tpu_custom_call.1} parent=27 // pred_fallthru
          _
        // Predicated region
        $region33: #{tpu_custom_call.1} parent=27 // pred_check
          %p157 = pneg %p62
        $region34: #{tpu_custom_call.1} parent=27 // pred_check_branch
          %159 = sbr.rel (%p157) target = $region36
        $region35: #{tpu_custom_call.1} parent=27 // pred_region
          %160 = dma.done [#allocation6], 384
        $region36: #{tpu_custom_call.1} parent=27 // pred_fallthru
          _
        %s161 = sand.u32 %s28, 1
        %s162 = scalar_lea.sflag [#allocation3], %s161
        %s163 = sand.u32 %s28, 1
        %s164 = smul.addr %s163, 16
        %s165 = scalar_lea.vmem [#allocation2], %s164
        %p166 = pneg %p41
        %p167 = pneg %p38
        %p168 = pneg %p62
        %p169 = pneg %p59
        %p170 = pneg %p88
        %p171 = pneg %p85
        %s172 = sand.u32 %s75, 1
        %s173 = scalar_lea.sflag [#allocation4], %s172
        %s174 = sand.u32 %s75, 1
        %s175 = smul.addr %s174, 16
        %s176 = scalar_lea.vmem [#allocation7], %s175
        %s177 = smul.u32 2, %s20
        %s178 = smul.u32 2, %s20
        %v179 = vld [vmem:[%s152] sm:$0xff]
        %v180 = vld [vmem:[%s152 + $0x8] sm:$0xff]
        %v181 = vld [vmem:[#allocation5] sm:$0xff]
        %v182 = vld [vmem:[#allocation5 + $0x8] sm:$0xff]
        %v183 = vld [vmem:[#allocation5 + $0x10] sm:$0x1]
        %vm184 = vcmask 138240
        %v186 = vsel %vm184, %v179, 0
        %v189 = vsel %vm184, %v180, 0
        %vm191 = vcmask 1040384
        %v193 = vsel %vm191, %v183, 0
        %195 = vmatprep.subr.mxu0 0.0
        %196 = vmatpush1.msra.mxu0 0.0
        %197 = vmatprep.subr.mxu0 0.0
        %198 = vmatpush1.msra.mxu0 0.0
        %199 = vmatprep.subr.mxu0 0.0
        %200 = vmatpush1.msra.mxu0 0.0
        %201 = vmatprep.subr.mxu0 0.0
        %202 = vmatpush1.msra.mxu0 0.0
        %203 = vmatprep.subr.mxu0 0.0
        %204 = vmatpush1.msra.mxu0 0.0
        %205 = vmatprep.subr.mxu0 0.0
        %206 = vmatpush1.msra.mxu0 0.0
        %207 = vmatprep.subr.mxu0 0.0
        %208 = vmatpush1.msra.mxu0 0.0
        %209 = vmatprep.subr.mxu0 0.0
        %210 = vmatpush1.msra.mxu0 0.0
        %211 = vmatprep.subr.mxu0 0.0
        %212 = vmatpush1.msra.mxu0 0.0
        %213 = vmatprep.subr.mxu0 0.0
        %214 = vmatpush1.msra.mxu0 0.0
        %215 = vmatprep.subr.mxu0 0.0
        %216 = vmatpush1.msra.mxu0 0.0
        %217 = vmatprep.subr.mxu0 0.0
        %218 = vmatpush1.msra.mxu0 0.0
        %219 = vmatprep.subr.mxu0 0.0
        %220 = vmatpush1.msra.mxu0 0.0
        %221 = vmatprep.subr.mxu0 0.0
        %222 = vmatpush1.msra.mxu0 %v193
        %223 = vmatprep.subr.mxu0 0.0
        %224 = vmatpush1.msra.mxu0 %v182
        %225 = vmatprep.subr.mxu0 0.0
        %226 = vmatpush1.msra.mxu0 %v181
        %227 = vmatprep.subr.mxu0 0.0
        %228 = vmatpush2.msra.mxu0 0.0
        %229 = vmatprep.subr.mxu0 0.0
        %230 = vmatpush2.msra.mxu0 0.0
        %231 = vmatprep.subr.mxu0 0.0
        %232 = vmatpush2.msra.mxu0 0.0
        %233 = vmatprep.subr.mxu0 0.0
        %234 = vmatpush2.msra.mxu0 0.0
        %235 = vmatprep.subr.mxu0 0.0
        %236 = vmatpush2.msra.mxu0 0.0
        %237 = vmatprep.subr.mxu0 0.0
        %238 = vmatpush2.msra.mxu0 0.0
        %239 = vmatprep.subr.mxu0 0.0
        %240 = vmatpush2.msra.mxu0 0.0
        %241 = vmatprep.subr.mxu0 0.0
        %242 = vmatpush2.msra.mxu0 0.0
        %243 = vmatprep.subr.mxu0 0.0
        %244 = vmatpush2.msra.mxu0 0.0
        %245 = vmatprep.subr.mxu0 0.0
        %246 = vmatpush2.msra.mxu0 0.0
        %247 = vmatprep.subr.mxu0 0.0
        %248 = vmatpush2.msra.mxu0 0.0
        %249 = vmatprep.subr.mxu0 0.0
        %250 = vmatpush2.msra.mxu0 0.0
        %251 = vmatprep.subr.mxu0 0.0
        %252 = vmatpush2.msra.mxu0 0.0
        %253 = vmatprep.subr.mxu0 0.0
        %254 = vmatpush2.msra.mxu0 0.0
        %255 = vmatprep.subr.mxu0 0.0
        %256 = vmatpush2.msra.mxu0 0.0
        %257 = vmatprep.subr.mxu0 0.0
        %258 = vmatpush2.msra.mxu0 0.0
        %259 = vmatprep.mubr.f32.mxu0 0.0
        %260 = vmatmul.mubr.f32.gmra.mxu0 %v186
        %v261 = vpop.f32.mrf.mxu0
        %v262 = vadd.f32 0.0, %v261
        %v263 = vpop.f32.mrf.mxu0
        %264 = vmatprep.mubr.f32.mxu0 0.0
        %265 = vmatmul.mubr.f32.gmra.mxu0 %v189
        %v266 = vpop.f32.mrf.mxu0
        %v267 = vadd.f32 0.0, %v266
        %v268 = vpop.f32.mrf.mxu0
        %269 = vdwg.mxu0
        %271 = vrot.lane.b32.xlu0 %v262, 120
        %v272 = vpop.permute.xlu0 %271
        %273 = vrot.lane.b32.xlu0 %v262, 119
        %v274 = vpop.permute.xlu0 %273
        %vm275 = vcmask 64512
        %v276 = vsel %vm275, %v272, 0
        %v278 = vsel %vm275, %v274, 0
        %280 = vmatprep.subr.mxu0 0.0
        %281 = vmatpush1.xpose.msra.mxu0 0.0
        %282 = vmatprep.subr.mxu0 0.0
        %283 = vmatpush1.xpose.msra.mxu0 0.0
        %284 = vmatprep.subr.mxu0 0.0
        %285 = vmatpush1.xpose.msra.mxu0 0.0
        %286 = vmatprep.subr.mxu0 0.0
        %287 = vmatpush1.xpose.msra.mxu0 0.0
        %288 = vmatprep.subr.mxu0 0.0
        %289 = vmatpush1.xpose.msra.mxu0 0.0
        %290 = vmatprep.subr.mxu0 0.0
        %291 = vmatpush1.xpose.msra.mxu0 0.0
        %292 = vmatprep.subr.mxu0 0.0
        %293 = vmatpush1.xpose.msra.mxu0 0.0
        %294 = vmatprep.subr.mxu0 0.0
        %295 = vmatpush1.xpose.msra.mxu0 0.0
        %296 = vmatprep.subr.mxu0 0.0
        %297 = vmatpush1.xpose.msra.mxu0 0.0
        %298 = vmatprep.subr.mxu0 0.0
        %299 = vmatpush1.xpose.msra.mxu0 0.0
        %300 = vmatprep.subr.mxu0 0.0
        %301 = vmatpush1.xpose.msra.mxu0 0.0
        %302 = vmatprep.subr.mxu0 0.0
        %303 = vmatpush1.xpose.msra.mxu0 0.0
        %304 = vmatprep.subr.mxu0 0.0
        %305 = vmatpush1.xpose.msra.mxu0 0.0
        %306 = vmatprep.subr.mxu0 0.0
        %307 = vmatpush1.xpose.msra.mxu0 0.0
        %308 = vmatprep.subr.mxu0 0.0
        %309 = vmatpush1.xpose.msra.mxu0 0.0
        %310 = vmatprep.subr.mxu0 0.0
        %311 = vmatpush1.xpose.msra.mxu0 %v278
        %312 = vmatprep.subr.mxu0 0.0
        %313 = vmatpush2.xpose.msra.mxu0 0.0
        %314 = vmatprep.subr.mxu0 0.0
        %315 = vmatpush2.xpose.msra.mxu0 0.0
        %316 = vmatprep.subr.mxu0 0.0
        %317 = vmatpush2.xpose.msra.mxu0 0.0
        %318 = vmatprep.subr.mxu0 0.0
        %319 = vmatpush2.xpose.msra.mxu0 0.0
        %320 = vmatprep.subr.mxu0 0.0
        %321 = vmatpush2.xpose.msra.mxu0 0.0
        %322 = vmatprep.subr.mxu0 0.0
        %323 = vmatpush2.xpose.msra.mxu0 0.0
        %324 = vmatprep.subr.mxu0 0.0
        %325 = vmatpush2.xpose.msra.mxu0 0.0
        %326 = vmatprep.subr.mxu0 0.0
        %327 = vmatpush2.xpose.msra.mxu0 0.0
        %328 = vmatprep.subr.mxu0 0.0
        %329 = vmatpush2.xpose.msra.mxu0 0.0
        %330 = vmatprep.subr.mxu0 0.0
        %331 = vmatpush2.xpose.msra.mxu0 0.0
        %332 = vmatprep.subr.mxu0 0.0
        %333 = vmatpush2.xpose.msra.mxu0 0.0
        %334 = vmatprep.subr.mxu0 0.0
        %335 = vmatpush2.xpose.msra.mxu0 0.0
        %336 = vmatprep.subr.mxu0 0.0
        %337 = vmatpush2.xpose.msra.mxu0 0.0
        %338 = vmatprep.subr.mxu0 0.0
        %339 = vmatpush2.xpose.msra.mxu0 0.0
        %340 = vmatprep.subr.mxu0 0.0
        %341 = vmatpush2.xpose.msra.mxu0 0.0
        %342 = vmatprep.subr.mxu0 0.0
        %343 = vmatpush2.xpose.msra.mxu0 0.0
        %344 = vmatprep.mubr.f32.mxu0 0.0
        %345 = vmatmul.mubr.f32.gmra.mxu0 %v276
        %v346 = vpop.f32.mrf.mxu0
        %v347 = vadd.f32 0.0, %v346
        %v348 = vpop.f32.mrf.mxu0
        %349 = vdwg.mxu0
        %351 = vrot.lane.b32.xlu0 %v267, 120
        %v352 = vpop.permute.xlu0 %351
        %353 = vrot.lane.b32.xlu0 %v267, 119
        %v354 = vpop.permute.xlu0 %353
        %v355 = vsel %vm275, %v352, 0
        %v357 = vsel %vm275, %v354, 0
        %359 = vmatprep.subr.mxu0 0.0
        %360 = vmatpush1.xpose.msra.mxu0 0.0
        %361 = vmatprep.subr.mxu0 0.0
        %362 = vmatpush1.xpose.msra.mxu0 0.0
        %363 = vmatprep.subr.mxu0 0.0
        %364 = vmatpush1.xpose.msra.mxu0 0.0
        %365 = vmatprep.subr.mxu0 0.0
        %366 = vmatpush1.xpose.msra.mxu0 0.0
        %367 = vmatprep.subr.mxu0 0.0
        %368 = vmatpush1.xpose.msra.mxu0 0.0
        %369 = vmatprep.subr.mxu0 0.0
        %370 = vmatpush1.xpose.msra.mxu0 0.0
        %371 = vmatprep.subr.mxu0 0.0
        %372 = vmatpush1.xpose.msra.mxu0 0.0
        %373 = vmatprep.subr.mxu0 0.0
        %374 = vmatpush1.xpose.msra.mxu0 0.0
        %375 = vmatprep.subr.mxu0 0.0
        %376 = vmatpush1.xpose.msra.mxu0 0.0
        %377 = vmatprep.subr.mxu0 0.0
        %378 = vmatpush1.xpose.msra.mxu0 0.0
        %379 = vmatprep.subr.mxu0 0.0
        %380 = vmatpush1.xpose.msra.mxu0 0.0
        %381 = vmatprep.subr.mxu0 0.0
        %382 = vmatpush1.xpose.msra.mxu0 0.0
        %383 = vmatprep.subr.mxu0 0.0
        %384 = vmatpush1.xpose.msra.mxu0 0.0
        %385 = vmatprep.subr.mxu0 0.0
        %386 = vmatpush1.xpose.msra.mxu0 0.0
        %387 = vmatprep.subr.mxu0 0.0
        %388 = vmatpush1.xpose.msra.mxu0 0.0
        %389 = vmatprep.subr.mxu0 0.0
        %390 = vmatpush1.xpose.msra.mxu0 %v357
        %391 = vmatprep.subr.mxu0 0.0
        %392 = vmatpush2.xpose.msra.mxu0 0.0
        %393 = vmatprep.subr.mxu0 0.0
        %394 = vmatpush2.xpose.msra.mxu0 0.0
        %395 = vmatprep.subr.mxu0 0.0
        %396 = vmatpush2.xpose.msra.mxu0 0.0
        %397 = vmatprep.subr.mxu0 0.0
        %398 = vmatpush2.xpose.msra.mxu0 0.0
        %399 = vmatprep.subr.mxu0 0.0
        %400 = vmatpush2.xpose.msra.mxu0 0.0
        %401 = vmatprep.subr.mxu0 0.0
        %402 = vmatpush2.xpose.msra.mxu0 0.0
        %403 = vmatprep.subr.mxu0 0.0
        %404 = vmatpush2.xpose.msra.mxu0 0.0
        %405 = vmatprep.subr.mxu0 0.0
        %406 = vmatpush2.xpose.msra.mxu0 0.0
        %407 = vmatprep.subr.mxu0 0.0
        %408 = vmatpush2.xpose.msra.mxu0 0.0
        %409 = vmatprep.subr.mxu0 0.0
        %410 = vmatpush2.xpose.msra.mxu0 0.0
        %411 = vmatprep.subr.mxu0 0.0
        %412 = vmatpush2.xpose.msra.mxu0 0.0
        %413 = vmatprep.subr.mxu0 0.0
        %414 = vmatpush2.xpose.msra.mxu0 0.0
        %415 = vmatprep.subr.mxu0 0.0
        %416 = vmatpush2.xpose.msra.mxu0 0.0
        %417 = vmatprep.subr.mxu0 0.0
        %418 = vmatpush2.xpose.msra.mxu0 0.0
        %419 = vmatprep.subr.mxu0 0.0
        %420 = vmatpush2.xpose.msra.mxu0 0.0
        %421 = vmatprep.subr.mxu0 0.0
        %422 = vmatpush2.xpose.msra.mxu0 0.0
        %423 = vmatprep.mubr.f32.mxu0 0.0
        %424 = vmatmul.mubr.f32.gmra.mxu0 %v355
        %v425 = vpop.f32.mrf.mxu0
        %v426 = vadd.f32 0.0, %v425
        %v427 = vpop.f32.mrf.mxu0
        %428 = vdwg.mxu0
        %vm429 = vcmp.gt.f32.partialorder %v347, 0.0
        %vm430 = vcmp.gt.f32.partialorder %v426, 0.0
        %v431 = vsel %vm429, %v347, -9e+15
        %v432 = vsel %vm430, %v426, -9e+15
        %v433 = vsel %vm275, %v431, -inf
        %434 = vmax.xlane.f32.xlu0 %v433
        %v435 = vpop.xlane.xlu0 %434
        %v436 = vsel %vm275, %v432, -inf
        %437 = vmax.xlane.f32.xlu0 %v436
        %v438 = vpop.xlane.xlu0 %437
        %v439 = vsub.f32 %v431, %v435
        %v440 = vsub.f32 %v432, %v438
        %v441 = vmul.f32 %v439, 1.442695
        %v442 = vpow.pop %v441
        %v443 = vmul.f32 %v440, 1.442695
        %v444 = vpow.pop %v443
        %v445 = vsel %vm275, %v442, 0.0
        %446 = vadd.xlane.f32.xlu0 %v445
        %v447 = vpop.xlane.xlu0 %446
        %v448 = vsel %vm275, %v444, 0.0
        %449 = vadd.xlane.f32.xlu0 %v448
        %v450 = vpop.xlane.xlu0 %449
        %v451 = vrcp.pop %v447
        %v452 = vrcp.pop %v450
        %v453 = vmul.f32 %v442, %v451
        %v454 = vmul.f32 %v444, %v452
        %v456 = vsel %vm275, %v453, 0
        %458 = vmatprep.subr.mxu0 0.0
        %459 = vmatpush1.msra.mxu0 0.0
        %460 = vmatprep.subr.mxu0 0.0
        %461 = vmatpush1.msra.mxu0 0.0
        %462 = vmatprep.subr.mxu0 0.0
        %463 = vmatpush1.msra.mxu0 0.0
        %464 = vmatprep.subr.mxu0 0.0
        %465 = vmatpush1.msra.mxu0 0.0
        %466 = vmatprep.subr.mxu0 0.0
        %467 = vmatpush1.msra.mxu0 0.0
        %468 = vmatprep.subr.mxu0 0.0
        %469 = vmatpush1.msra.mxu0 0.0
        %470 = vmatprep.subr.mxu0 0.0
        %471 = vmatpush1.msra.mxu0 0.0
        %472 = vmatprep.subr.mxu0 0.0
        %473 = vmatpush1.msra.mxu0 0.0
        %474 = vmatprep.subr.mxu0 0.0
        %475 = vmatpush1.msra.mxu0 0.0
        %476 = vmatprep.subr.mxu0 0.0
        %477 = vmatpush1.msra.mxu0 0.0
        %478 = vmatprep.subr.mxu0 0.0
        %479 = vmatpush1.msra.mxu0 0.0
        %480 = vmatprep.subr.mxu0 0.0
        %481 = vmatpush1.msra.mxu0 0.0
        %482 = vmatprep.subr.mxu0 0.0
        %483 = vmatpush1.msra.mxu0 0.0
        %484 = vmatprep.subr.mxu0 0.0
        %485 = vmatpush1.msra.mxu0 0.0
        %486 = vmatprep.subr.mxu0 0.0
        %487 = vmatpush1.msra.mxu0 0.0
        %488 = vmatprep.subr.mxu0 0.0
        %489 = vmatpush1.msra.mxu0 %v262
        %490 = vmatprep.subr.mxu0 0.0
        %491 = vmatpush2.msra.mxu0 0.0
        %492 = vmatprep.subr.mxu0 0.0
        %493 = vmatpush2.msra.mxu0 0.0
        %494 = vmatprep.subr.mxu0 0.0
        %495 = vmatpush2.msra.mxu0 0.0
        %496 = vmatprep.subr.mxu0 0.0
        %497 = vmatpush2.msra.mxu0 0.0
        %498 = vmatprep.subr.mxu0 0.0
        %499 = vmatpush2.msra.mxu0 0.0
        %500 = vmatprep.subr.mxu0 0.0
        %501 = vmatpush2.msra.mxu0 0.0
        %502 = vmatprep.subr.mxu0 0.0
        %503 = vmatpush2.msra.mxu0 0.0
        %504 = vmatprep.subr.mxu0 0.0
        %505 = vmatpush2.msra.mxu0 0.0
        %506 = vmatprep.subr.mxu0 0.0
        %507 = vmatpush2.msra.mxu0 0.0
        %508 = vmatprep.subr.mxu0 0.0
        %509 = vmatpush2.msra.mxu0 0.0
        %510 = vmatprep.subr.mxu0 0.0
        %511 = vmatpush2.msra.mxu0 0.0
        %512 = vmatprep.subr.mxu0 0.0
        %513 = vmatpush2.msra.mxu0 0.0
        %514 = vmatprep.subr.mxu0 0.0
        %515 = vmatpush2.msra.mxu0 0.0
        %516 = vmatprep.subr.mxu0 0.0
        %517 = vmatpush2.msra.mxu0 0.0
        %518 = vmatprep.subr.mxu0 0.0
        %519 = vmatpush2.msra.mxu0 0.0
        %520 = vmatprep.subr.mxu0 0.0
        %521 = vmatpush2.msra.mxu0 0.0
        %522 = vmatprep.mubr.f32.mxu0 0.0
        %523 = vmatmul.mubr.f32.gmra.mxu0 %v456
        %v524 = vpop.f32.mrf.mxu0
        %v525 = vadd.f32 0.0, %v524
        %v526 = vpop.f32.mrf.mxu0
        %527 = vdwg.mxu0
        %v529 = vsel %vm275, %v454, 0
        %531 = vmatprep.subr.mxu0 0.0
        %532 = vmatpush1.msra.mxu0 0.0
        %533 = vmatprep.subr.mxu0 0.0
        %534 = vmatpush1.msra.mxu0 0.0
        %535 = vmatprep.subr.mxu0 0.0
        %536 = vmatpush1.msra.mxu0 0.0
        %537 = vmatprep.subr.mxu0 0.0
        %538 = vmatpush1.msra.mxu0 0.0
        %539 = vmatprep.subr.mxu0 0.0
        %540 = vmatpush1.msra.mxu0 0.0
        %541 = vmatprep.subr.mxu0 0.0
        %542 = vmatpush1.msra.mxu0 0.0
        %543 = vmatprep.subr.mxu0 0.0
        %544 = vmatpush1.msra.mxu0 0.0
        %545 = vmatprep.subr.mxu0 0.0
        %546 = vmatpush1.msra.mxu0 0.0
        %547 = vmatprep.subr.mxu0 0.0
        %548 = vmatpush1.msra.mxu0 0.0
        %549 = vmatprep.subr.mxu0 0.0
        %550 = vmatpush1.msra.mxu0 0.0
        %551 = vmatprep.subr.mxu0 0.0
        %552 = vmatpush1.msra.mxu0 0.0
        %553 = vmatprep.subr.mxu0 0.0
        %554 = vmatpush1.msra.mxu0 0.0
        %555 = vmatprep.subr.mxu0 0.0
        %556 = vmatpush1.msra.mxu0 0.0
        %557 = vmatprep.subr.mxu0 0.0
        %558 = vmatpush1.msra.mxu0 0.0
        %559 = vmatprep.subr.mxu0 0.0
        %560 = vmatpush1.msra.mxu0 0.0
        %561 = vmatprep.subr.mxu0 0.0
        %562 = vmatpush1.msra.mxu0 %v267
        %563 = vmatprep.subr.mxu0 0.0
        %564 = vmatpush2.msra.mxu0 0.0
        %565 = vmatprep.subr.mxu0 0.0
        %566 = vmatpush2.msra.mxu0 0.0
        %567 = vmatprep.subr.mxu0 0.0
        %568 = vmatpush2.msra.mxu0 0.0
        %569 = vmatprep.subr.mxu0 0.0
        %570 = vmatpush2.msra.mxu0 0.0
        %571 = vmatprep.subr.mxu0 0.0
        %572 = vmatpush2.msra.mxu0 0.0
        %573 = vmatprep.subr.mxu0 0.0
        %574 = vmatpush2.msra.mxu0 0.0
        %575 = vmatprep.subr.mxu0 0.0
        %576 = vmatpush2.msra.mxu0 0.0
        %577 = vmatprep.subr.mxu0 0.0
        %578 = vmatpush2.msra.mxu0 0.0
        %579 = vmatprep.subr.mxu0 0.0
        %580 = vmatpush2.msra.mxu0 0.0
        %581 = vmatprep.subr.mxu0 0.0
        %582 = vmatpush2.msra.mxu0 0.0
        %583 = vmatprep.subr.mxu0 0.0
        %584 = vmatpush2.msra.mxu0 0.0
        %585 = vmatprep.subr.mxu0 0.0
        %586 = vmatpush2.msra.mxu0 0.0
        %587 = vmatprep.subr.mxu0 0.0
        %588 = vmatpush2.msra.mxu0 0.0
        %589 = vmatprep.subr.mxu0 0.0
        %590 = vmatpush2.msra.mxu0 0.0
        %591 = vmatprep.subr.mxu0 0.0
        %592 = vmatpush2.msra.mxu0 0.0
        %593 = vmatprep.subr.mxu0 0.0
        %594 = vmatpush2.msra.mxu0 0.0
        %595 = vmatprep.mubr.f32.mxu0 0.0
        %596 = vmatmul.mubr.f32.gmra.mxu0 %v529
        %v597 = vpop.f32.mrf.mxu0
        %v598 = vadd.f32 0.0, %v597
        %v599 = vpop.f32.mrf.mxu0
        %600 = vdwg.mxu0
        %vm601 = vcmp.gt.f32.partialorder %v525, 0.0
        %vm602 = vcmp.gt.f32.partialorder %v598, 0.0
        %v603 = vmul.f32 %v525, 1.442695
        %v604 = vpow.pop %v603
        %v605 = vmul.f32 %v598, 1.442695
        %v606 = vpow.pop %v605
        %v607 = vsub.f32 %v604, 1.0
        %v608 = vsub.f32 %v606, 1.0
        %v609 = vsel %vm601, %v525, %v607
        %v610 = vsel %vm602, %v598, %v608
        %611 = vst [vmem:[%s176] sm:$0xff] %v609
        %612 = vst [vmem:[%s176 + $0x8] sm:$0xff] %v610
        %s613 = sand.u32 %s75, 1
        %s614 = scalar_lea.sflag [#allocation4], %s613
        %s615 = sand.u32 %s75, 1
        %s616 = smul.addr %s615, 16
        %s617 = scalar_lea.vmem [#allocation7], %s616
        // Predicated region
        $region37: #{tpu_custom_call.1} parent=27 // pred_check
          %p618 = pneg %p85
        $region38: #{tpu_custom_call.1} parent=27 // pred_check_branch
          %620 = sbr.rel (%p618) target = $region40
        $region39: #{tpu_custom_call.1} parent=27 // pred_region
          %s621 = smul.u32 2, %s20
          %s623 = ssub.s32 256, 256
          %624 = vsyncadd %s614, %s623
          %s625 = smul.addr %s621, 128
          %s626 = scalar_lea.hbm %s2, %s625
          %s627 = sshll.u32 %s617, 4
          %s628 = int_to_ptr.vmem [resolvable:$true] %s627
          %633 = dma.vmem_to_hbm [thread:$0]  %s628, 256, %s626, %s614, 128, 128, 8
        $region40: #{tpu_custom_call.1} parent=27 // pred_fallthru
          _
      $region28: #{tpu_custom_call.1} parent=5 // pred_fallthru
        _
      %p634 = scmp.le.s32.totalorder 2, %s15
      // Predicated region
      $region41: #{tpu_custom_call.1} parent=5 // pred_check
        %p635 = pneg %p634
      $region42: #{tpu_custom_call.1} parent=5 // pred_check_branch
        %637 = sbr.rel (%p635) target = $region44
      $region43: #{tpu_custom_call.1} parent=5 // pred_region
        %s638 = ssub.s32 %s15, 2
        // Predicated region
        $region45: #{tpu_custom_call.1} parent=43 // pred_check
          %p639 = pneg %p91
        $region46: #{tpu_custom_call.1} parent=43 // pred_check_branch
          %641 = sbr.rel (%p639) target = $region48
        $region47: #{tpu_custom_call.1} parent=43 // pred_region
          %s642 = sand.u32 %s76, 1
          %s643 = scalar_lea.sflag [#allocation4], %s642
          %s644 = sand.u32 %s76, 1
          %s645 = smul.addr %s644, 16
          %s646 = scalar_lea.vmem [#allocation7], %s645
          %647 = dma.done %s643, 256
        $region48: #{tpu_custom_call.1} parent=43 // pred_fallthru
          _
      $region44: #{tpu_custom_call.1} parent=5 // pred_fallthru
        _
    $region6: #{tpu_custom_call.1} parent=1 // loop_footer
      %s19 = sadd.s32 1, %s15
    $region7: #{tpu_custom_call.1} parent=1 // loop_footer_branch
      %14 = sbr.rel target = $region3
    $region8: #{tpu_custom_call.1} parent=1 // loop_exit
      _
    %648 = vsyncpa [#allocation3], 1
    %s649 = scalar_lea.sflag [#allocation3], 1
    %650 = vsyncpa %s649, 1
    %651 = vsyncpa [#allocation6], 1
    %652 = vsyncpa [#allocation4], 1
    %s653 = scalar_lea.sflag [#allocation4], 1
    %654 = vsyncpa %s653, 1

</llo_original>
